<compile_context>
chip_gen: v7x
topology: tpu7x:2x2x1
jax: 0.10.0
libtpu: 0.0.40
codegen_flags: <defaults>
</compile_context>

<pallas_src>
import functools

import jax
import jax.numpy as jnp
from jax.experimental import pallas as pl
from jax.experimental.pallas import tpu as pltpu


# --------------------------- helpers ----------------------------------------

def _tile(dim, cap):
    """Largest tile: full dim if small / non-divisible, else the cap (8/128-aligned)."""
    return dim if (dim <= cap or dim % cap != 0) else cap


# --------------------- fused ConvNeXt-SE block kernel ------------------------

def _block_kernel(x_ref, dww_ref, dwb_ref, lng_ref, lnb_ref,
                  w1_ref, b1_ref, s1w_ref, s1b_ref, s2w_ref, s2b_ref,
                  w2_ref, b2_ref, o_ref, pad_ref, y_ref,
                  *, H, W, C, K, P, eps, use_se):
    """One batch element per grid step; everything stays resident in VMEM."""
    # ---- depthwise conv: halo handled in a VMEM scratch (no HBM padded copy) ----
    pad_ref[...] = jnp.zeros_like(pad_ref)
    for h in range(H):                                    # static, small H
        pad_ref[P + h, P:P + W, :] = x_ref[h * W:(h + 1) * W, :]

    acc = jnp.zeros((H, W, C), jnp.float32)
    for i in range(K):                                    # static unroll over taps
        for j in range(K):
            acc = acc + pad_ref[i:i + H, j:j + W, :] * dww_ref[i:i + 1, j:j + 1, :]
    acc = acc + dwb_ref[...]

    # ---- LayerNorm over channels (f32 statistics) ----
    mu = jnp.mean(acc, axis=-1, keepdims=True)
    var = jnp.mean(jnp.square(acc - mu), axis=-1, keepdims=True)
    yn = (acc - mu) * jax.lax.rsqrt(var + eps) * lng_ref[...] + lnb_ref[...]

    # (H, W, C) -> (H*W, C) handoff through scratch (avoids in-kernel reshape)
    for h in range(H):
        y_ref[h * W:(h + 1) * W, :] = yn[h]
    y2d = y_ref[...]

    # ---- 1x1 expand + GELU (bf16 MXU operands, f32 accumulate) ----
    e = jnp.dot(y2d.astype(jnp.bfloat16), w1_ref[...].astype(jnp.bfloat16),
                preferred_element_type=jnp.float32) + b1_ref[...]
    # TODO(synk): PyTorch nn.GELU default is exact erf; tanh approximation used here.
    e = jax.nn.gelu(e, approximate=True)

    # ---- Squeeze-Excite gate (global mean is an in-register sublane reduce) ----
    if use_se:
        pooled = jnp.mean(e, axis=0, keepdims=True)                    # (1, E)
        s = jnp.dot(pooled.astype(jnp.bfloat16), s1w_ref[...].astype(jnp.bfloat16),
                    preferred_element_type=jnp.float32) + s1b_ref[...]
        s = jnp.maximum(s, 0.0)
        s = jnp.dot(s.astype(jnp.bfloat16), s2w_ref[...].astype(jnp.bfloat16),
                    preferred_element_type=jnp.float32) + s2b_ref[...]
        s = jax.nn.sigmoid(s)
        e = e * s

    # ---- 1x1 project + residual add (fused into the same kernel) ----
    # TODO(synk): stochastic depth with droprate=0.0 (eval) is the identity.
    out = jnp.dot(e.astype(jnp.bfloat16), w2_ref[...].astype(jnp.bfloat16),
                  preferred_element_type=jnp.float32) + b2_ref[...] + x_ref[...]
    o_ref[...] = out


def convnext_se_block(x2d, p, H, W, pad, use_se, eps=1e-6):
    """x2d: (B, H*W, C) NHWC-flattened activation. Whole block in one pallas_call."""
    B, HW, C = x2d.shape
    K = p["dw_w"].shape[0]
    E = p["pw1"]["w"].shape[1]
    R = p["se1"]["w"].shape[1]
    Hp, Wp = H + 2 * pad, W + 2 * pad

    def full(shape):
        return pl.BlockSpec(shape, lambda b: (0,) * len(shape))

    kernel = functools.partial(_block_kernel, H=H, W=W, C=C, K=K, P=pad,
                               eps=eps, use_se=use_se)
    return pl.pallas_call(
        kernel,
        out_shape=jax.ShapeDtypeStruct((B, HW, C), jnp.float32),
        grid=(B,),
        in_specs=[
            pl.BlockSpec((None, HW, C), lambda b: (b, 0, 0)),   # x (batch dim squeezed)
            full((K, K, C)),                                    # depthwise weight
            full((1, 1, C)), full((1, 1, C)), full((1, 1, C)),  # dw bias, ln gamma/beta
            full((C, E)), full((1, E)),                         # pw1
            full((E, R)), full((1, R)),                         # se1
            full((R, E)), full((1, E)),                         # se2
            full((E, C)), full((1, C)),                         # pw2
        ],
        out_specs=pl.BlockSpec((None, HW, C), lambda b: (b, 0, 0)),
        scratch_shapes=[pltpu.VMEM((Hp, Wp, C), jnp.float32),   # padded dwconv input
                        pltpu.VMEM((HW, C), jnp.float32)],      # 2D handoff buffer
        compiler_params=pltpu.CompilerParams(dimension_semantics=("parallel",)),
    )(x2d,
      p["dw_w"], p["dw_b"].reshape(1, 1, C),
      p["ln_g"].reshape(1, 1, C), p["ln_b"].reshape(1, 1, C),
      p["pw1"]["w"], p["pw1"]["b"].reshape(1, E),
      p["se1"]["w"], p["se1"]["b"].reshape(1, R),
      p["se2"]["w"], p["se2"]["b"].reshape(1, E),
      p["pw2"]["w"], p["pw2"]["b"].reshape(1, C))


# ------------- tiled matmul (+ bias, optional LayerNorm epilogue) -------------

def _matmul_epilogue_kernel(*refs, nk, fuse_ln, eps):
    if fuse_ln:
        x_ref, w_ref, b_ref, g_ref, bt_ref, o_ref, acc_ref = refs
    else:
        x_ref, w_ref, b_ref, o_ref, acc_ref = refs
        g_ref = bt_ref = None
    k = pl.program_id(1)

    @pl.when(k == 0)
    def _():
        acc_ref[...] = jnp.zeros_like(acc_ref)

    acc_ref[...] += jnp.dot(x_ref[...].astype(jnp.bfloat16),
                            w_ref[...].astype(jnp.bfloat16),
                            preferred_element_type=jnp.float32)

    @pl.when(k == nk - 1)
    def _():
        y = acc_ref[...] + b_ref[...]
        if fuse_ln:
            mu = jnp.mean(y, axis=-1, keepdims=True)
            var = jnp.mean(jnp.square(y - mu), axis=-1, keepdims=True)
            y = (y - mu) * jax.lax.rsqrt(var + eps) * g_ref[...] + bt_ref[...]
        o_ref[...] = y


def matmul_bias_ln(x, w, b, gamma=None, beta=None, eps=1e-6):
    """(M,K)@(K,N)+b, tiled over M ("parallel") and K ("arbitrary") with a f32
    VMEM accumulator; optional fused LayerNorm(channels) epilogue."""
    M, Kd = x.shape
    N = w.shape[1]
    tm = _tile(M, 256)
    tk = _tile(Kd, 512)
    nk = Kd // tk
    fuse_ln = gamma is not None
    kernel = functools.partial(_matmul_epilogue_kernel, nk=nk, fuse_ln=fuse_ln, eps=eps)

    in_specs = [pl.BlockSpec((tm, tk), lambda i, k: (i, k)),
                pl.BlockSpec((tk, N), lambda i, k: (k, 0)),
                pl.BlockSpec((1, N), lambda i, k: (0, 0))]
    args = [x, w, b.reshape(1, N)]
    if fuse_ln:
        in_specs += [pl.BlockSpec((1, N), lambda i, k: (0, 0)),
                     pl.BlockSpec((1, N), lambda i, k: (0, 0))]
        args += [gamma.reshape(1, N), beta.reshape(1, N)]

    return pl.pallas_call(
        kernel,
        out_shape=jax.ShapeDtypeStruct((M, N), jnp.float32),
        grid=(M // tm, nk),
        in_specs=in_specs,
        out_specs=pl.BlockSpec((tm, N), lambda i, k: (i, 0)),
        scratch_shapes=[pltpu.VMEM((tm, N), jnp.float32)],
        compiler_params=pltpu.CompilerParams(
            dimension_semantics=("parallel", "arbitrary")),
    )(*args)


# --------------------- tiled LayerNorm (transition pre-norm) ------------------

def _ln_kernel(x_ref, g_ref, b_ref, o_ref, *, eps):
    x = x_ref[...]
    mu = jnp.mean(x, axis=-1, keepdims=True)
    var = jnp.mean(jnp.square(x - mu), axis=-1, keepdims=True)
    o_ref[...] = (x - mu) * jax.lax.rsqrt(var + eps) * g_ref[...] + b_ref[...]


def layernorm(x, gamma, beta, eps=1e-6):
    M, C = x.shape
    tm = _tile(M, 1024)
    return pl.pallas_call(
        functools.partial(_ln_kernel, eps=eps),
        out_shape=jax.ShapeDtypeStruct((M, C), jnp.float32),
        grid=(M // tm,),
        in_specs=[pl.BlockSpec((tm, C), lambda i: (i, 0)),
                  pl.BlockSpec((1, C), lambda i: (0, 0)),
                  pl.BlockSpec((1, C), lambda i: (0, 0))],
        out_specs=pl.BlockSpec((tm, C), lambda i: (i, 0)),
        compiler_params=pltpu.CompilerParams(dimension_semantics=("parallel",)),
    )(x, gamma.reshape(1, C), beta.reshape(1, C))


# -------------------------- glue (patchify / im2col) --------------------------

def patchify_conv(x, w, b, kersz, stride, gamma=None, beta=None):
    """Conv with kernel == stride (stem / transition downsample) as im2col +
    tiled Pallas matmul with fused bias (+ optional LayerNorm) epilogue."""
    B, H, W, C = x.shape
    kh, kw = kersz
    assert (kh, kw) == tuple(stride), "stem/transition conv assumed kernel == stride"
    assert H % kh == 0 and W % kw == 0
    Ho, Wo = H // kh, W // kw
    # TODO(synk): im2col patches still materialize via XLA reshape/transpose; small
    #             relative to per-block activation traffic (stem/transition only).
    patches = x.reshape(B, Ho, kh, Wo, kw, C).transpose(0, 1, 3, 2, 4, 5)
    patches = patches.reshape(B * Ho * Wo, kh * kw * C)
    y = matmul_bias_ln(patches, w, b, gamma, beta)
    return y.reshape(B, Ho, Wo, w.shape[1])


# ------------------------------- model parts ----------------------------------

def detector_backbone_forward(x_nchw, params, cfg):
    """Reproduces DetectorBackbone.forward: returns a list of per-stage outputs (NCHW)."""
    x = jnp.transpose(x_nchw, (0, 2, 3, 1)).astype(jnp.float32)      # NCHW -> NHWC once
    # Stem: patchify conv with fused bias + LayerNorm epilogue
    x = patchify_conv(x, params["stem"]["w"], params["stem"]["b"],
                      cfg["stem_kersz"], cfg["stem_stride"],
                      params["stem"]["ln_g"], params["stem"]["ln_b"])

    outputs = []
    for i in range(len(cfg["num_blocks"])):
        sp = params["stages"][i]
        if i > 0:
            # Transition: LayerNorm then strided patchify conv downsample
            B, H, W, C = x.shape
            xn = layernorm(x.reshape(B * H * W, C),
                           sp["trans_ln_g"], sp["trans_ln_b"]).reshape(B, H, W, C)
            x = patchify_conv(xn, sp["trans_w"], sp["trans_b"],
                              cfg["transition_kersz"][i], cfg["transition_stride"][i])
        B, H, W, C = x.shape
        x2 = x.reshape(B, H * W, C)          # contiguous NHWC flatten (metadata only)
        for bp in sp["blocks"]:
            x2 = convnext_se_block(x2, bp, H, W, cfg["padding"][i], cfg["use_se"][i])
        x = x2.reshape(B, H, W, C)
        outputs.append(jnp.transpose(x, (0, 3, 1, 2)))               # NCHW stage output
    return outputs


# ---------------------------- parameter creation -------------------------------

def _dense(key, cin, cout, scale=0.05):
    k1, k2 = jax.random.split(key)
    return {"w": scale * jax.random.normal(k1, (cin, cout), jnp.float32),
            "b": scale * jax.random.normal(k2, (cout,), jnp.float32)}


def _block_params(key, c, e, k, ratio):
    keys = jax.random.split(key, 5)
    return {
        "dw_w": 0.05 * jax.random.normal(keys[0], (k, k, c), jnp.float32),
        "dw_b": jnp.zeros((c,), jnp.float32),
        "ln_g": jnp.ones((c,), jnp.float32),
        "ln_b": jnp.zeros((c,), jnp.float32),
        "pw1": _dense(keys[1], c, e),
        "se1": _dense(keys[2], e, max(e // ratio, 1)),
        "se2": _dense(keys[3], max(e // ratio, 1), e),
        "pw2": _dense(keys[4], e, c),
    }


def init_params(key, cfg):
    keys = jax.random.split(key, 1 + len(cfg["num_blocks"]))
    kh, kw = cfg["stem_kersz"]
    c0 = cfg["main_channels"][0]
    sd = _dense(keys[0], kh * kw * cfg["input_channels"], c0)
    stem = {"w": sd["w"], "b": sd["b"],
            "ln_g": jnp.ones((c0,), jnp.float32),
            "ln_b": jnp.zeros((c0,), jnp.float32)}
    stages = []
    for i in range(len(cfg["num_blocks"])):
        c = cfg["main_channels"][i]
        e = cfg["expansion_dim"][i]
        k = cfg["kernel_sz"][i]
        bkeys = jax.random.split(keys[1 + i], cfg["num_blocks"][i] + 1)
        sp = {"blocks": [_block_params(bkeys[j + 1], c, e, k, cfg["squeeze_ratio"])
                         for j in range(cfg["num_blocks"][i])]}
        if i > 0:
            cprev = cfg["main_channels"][i - 1]
            tkh, tkw = cfg["transition_kersz"][i]
            td = _dense(bkeys[0], tkh * tkw * cprev, c)
            sp.update({"trans_w": td["w"], "trans_b": td["b"],
                       "trans_ln_g": jnp.ones((cprev,), jnp.float32),
                       "trans_ln_b": jnp.zeros((cprev,), jnp.float32)})
        stages.append(sp)
    return {"stem": stem, "stages": stages}


# ---------------------------------- config -------------------------------------

CFG = dict(
    num_blocks=[1, 1],
    input_channels=4,
    stem_kersz=(4, 4),
    stem_stride=(4, 4),
    img_hw=[[4, 4], [2, 2]],
    main_channels=[16, 32],
    expansion_dim=[32, 64],
    kernel_sz=[3, 3],
    stride=[1, 1],
    padding=[1, 1],
    dilation=[1, 1],
    groups=[16, 32],          # depthwise (groups == channels)
    droprate=[0.0, 0.0],
    drop_mode=["row", "row"],
    use_se=[True, True],
    squeeze_ratio=4,
    transition_kersz=[None, (2, 2)],
    transition_stride=[None, (2, 2)],
    norm_mode="layer_norm",
)


if __name__ == "__main__":
    key = jax.random.PRNGKey(0)
    kx, kp = jax.random.split(key)
    x = jax.random.normal(kx, (2, 4, 16, 16), jnp.float32)   # NCHW, like PyTorch
    params = init_params(kp, CFG)

    outs = detector_backbone_forward(x, params, CFG)
    outs = jax.block_until_ready(outs)

    assert outs[0].shape == (2, 16, 4, 4), outs[0].shape
    assert outs[1].shape == (2, 32, 2, 2), outs[1].shape
    assert all(bool(jnp.all(jnp.isfinite(o))) for o in outs)
    print("KERNEL_OK")
</pallas_src>

<mosaic_0001>
module attributes {stable_mosaic.version = 11 : i64} {
  func.func @_matmul_epilogue_kernel(%arg0: i32, %arg1: i32, %arg2: memref<32x64xf32, #tpu.memory_space<vmem>>, %arg3: memref<64x16xf32, #tpu.memory_space<vmem>>, %arg4: memref<1x16xf32, #tpu.memory_space<vmem>>, %arg5: memref<1x16xf32, #tpu.memory_space<vmem>>, %arg6: memref<1x16xf32, #tpu.memory_space<vmem>>, %arg7: memref<32x16xf32, #tpu.memory_space<vmem>>, %arg8: memref<32x16xf32, #tpu.memory_space<vmem>>) attributes {dimension_semantics = [#tpu.dimension_semantics<parallel>, #tpu.dimension_semantics<arbitrary>], iteration_bounds = array<i64: 1, 1>, scalar_prefetch = 0 : i64, scratch_operands = 1 : i64, tpu.core_type = #tpu.core_type<tc>, window_params = [{transform_indices = @transform_0, window_bounds = array<i64: 32, 64>}, {transform_indices = @transform_1, window_bounds = array<i64: 64, 16>}, {pipeline_mode = #tpu.pipeline_mode<synchronous>, transform_indices = @transform_2, window_bounds = array<i64: 1, 16>}, {pipeline_mode = #tpu.pipeline_mode<synchronous>, transform_indices = @transform_3, window_bounds = array<i64: 1, 16>}, {pipeline_mode = #tpu.pipeline_mode<synchronous>, transform_indices = @transform_4, window_bounds = array<i64: 1, 16>}, {transform_indices = @transform_5, window_bounds = array<i64: 32, 16>}]} {
    %c0_i32 = arith.constant 0 : i32
    %0 = arith.cmpi eq, %arg1, %c0_i32 : i32
    %1 = arith.extui %0 : i1 to i32
    %c0_i32_0 = arith.constant 0 : i32
    %2 = arith.cmpi ne, %1, %c0_i32_0 : i32
    scf.if %2 {
      %cst_10 = arith.constant 0.000000e+00 : f32
      %14 = vector.broadcast %cst_10 : f32 to vector<32x16xf32>
      %c0_11 = arith.constant 0 : index
      %c0_12 = arith.constant 0 : index
      %15 = vector.load %arg8[%c0_11, %c0_12] : memref<32x16xf32, #tpu.memory_space<vmem>>, vector<32x16xf32>
      tpu.vector_store %arg8[%c0_11, %c0_12], %14 {strides = array<i32>} : memref<32x16xf32, #tpu.memory_space<vmem>>, vector<32x16xf32>,
    } else {
    }
    %c0 = arith.constant 0 : index
    %c0_1 = arith.constant 0 : index
    %3 = vector.load %arg8[%c0, %c0_1] : memref<32x16xf32, #tpu.memory_space<vmem>>, vector<32x16xf32>
    %c0_2 = arith.constant 0 : index
    %c0_3 = arith.constant 0 : index
    %4 = vector.load %arg2[%c0_2, %c0_3] : memref<32x64xf32, #tpu.memory_space<vmem>>, vector<32x64xf32>
    %5 = arith.truncf %4 : vector<32x64xf32> to vector<32x64xbf16>
    %c0_4 = arith.constant 0 : index
    %c0_5 = arith.constant 0 : index
    %6 = vector.load %arg3[%c0_4, %c0_5] : memref<64x16xf32, #tpu.memory_space<vmem>>, vector<64x16xf32>
    %7 = arith.truncf %6 : vector<64x16xf32> to vector<64x16xbf16>
    %cst = arith.constant dense<0.000000e+00> : vector<32x16xf32>
    %8 = tpu.matmul %5, %7, %cst {dimension_numbers = #tpu.dot_dimension_numbers<[1], [0], [0], [1], [0, 0, 1, 1], [], []>} : vector<32x64xbf16>, vector<64x16xbf16>, vector<32x16xf32> -> vector<32x16xf32>
    %9 = arith.addf %3, %8 : vector<32x16xf32>
    %c0_6 = arith.constant 0 : index
    %c0_7 = arith.constant 0 : index
    %10 = vector.load %arg8[%c0_6, %c0_7] : memref<32x16xf32, #tpu.memory_space<vmem>>, vector<32x16xf32>
    tpu.vector_store %arg8[%c0_6, %c0_7], %9 {strides = array<i32>} : memref<32x16xf32, #tpu.memory_space<vmem>>, vector<32x16xf32>,
    %c0_i32_8 = arith.constant 0 : i32
    %11 = arith.cmpi eq, %arg1, %c0_i32_8 : i32
    %12 = arith.extui %11 : i1 to i32
    %c0_i32_9 = arith.constant 0 : i32
    %13 = arith.cmpi ne, %12, %c0_i32_9 : i32
    scf.if %13 {
      %c0_10 = arith.constant 0 : index
      %c0_11 = arith.constant 0 : index
      %14 = vector.load %arg8[%c0_10, %c0_11] : memref<32x16xf32, #tpu.memory_space<vmem>>, vector<32x16xf32>
      %c0_12 = arith.constant 0 : index
      %c0_13 = arith.constant 0 : index
      %15 = vector.load %arg4[%c0_12, %c0_13] : memref<1x16xf32, #tpu.memory_space<vmem>>, vector<1x16xf32>
      %16 = vector.broadcast %15 : vector<1x16xf32> to vector<32x16xf32>
      %17 = arith.addf %14, %16 : vector<32x16xf32>
      %cst_14 = arith.constant dense<0.000000e+00> : vector<32xf32>
      %18 = vector.multi_reduction <add>, %17, %cst_14 [1] : vector<32x16xf32> to vector<32xf32>
      %19 = vector.shape_cast %18 : vector<32xf32> to vector<32x1xf32>
      %cst_15 = arith.constant 1.600000e+01 : f32
      %20 = vector.broadcast %cst_15 : f32 to vector<32x1xf32>
      %21 = arith.divf %19, %20 : vector<32x1xf32>
      %22 = vector.broadcast %21 : vector<32x1xf32> to vector<32x16xf32>
      %23 = arith.subf %17, %22 : vector<32x16xf32>
      %24 = arith.mulf %23, %23 : vector<32x16xf32>
      %cst_16 = arith.constant dense<0.000000e+00> : vector<32xf32>
      %25 = vector.multi_reduction <add>, %24, %cst_16 [1] : vector<32x16xf32> to vector<32xf32>
      %26 = vector.shape_cast %25 : vector<32xf32> to vector<32x1xf32>
      %cst_17 = arith.constant 1.600000e+01 : f32
      %27 = vector.broadcast %cst_17 : f32 to vector<32x1xf32>
      %28 = arith.divf %26, %27 : vector<32x1xf32>
      %29 = vector.broadcast %21 : vector<32x1xf32> to vector<32x16xf32>
      %30 = arith.subf %17, %29 : vector<32x16xf32>
      %cst_18 = arith.constant 9.99999997E-7 : f32
      %31 = vector.broadcast %cst_18 : f32 to vector<32x1xf32>
      %32 = arith.addf %28, %31 : vector<32x1xf32>
      %33 = math.rsqrt %32 : vector<32x1xf32>
      %34 = vector.broadcast %33 : vector<32x1xf32> to vector<32x16xf32>
      %35 = arith.mulf %30, %34 : vector<32x16xf32>
      %c0_19 = arith.constant 0 : index
      %c0_20 = arith.constant 0 : index
      %36 = vector.load %arg5[%c0_19, %c0_20] : memref<1x16xf32, #tpu.memory_space<vmem>>, vector<1x16xf32>
      %37 = vector.broadcast %36 : vector<1x16xf32> to vector<32x16xf32>
      %38 = arith.mulf %35, %37 : vector<32x16xf32>
      %c0_21 = arith.constant 0 : index
      %c0_22 = arith.constant 0 : index
      %39 = vector.load %arg6[%c0_21, %c0_22] : memref<1x16xf32, #tpu.memory_space<vmem>>, vector<1x16xf32>
      %40 = vector.broadcast %39 : vector<1x16xf32> to vector<32x16xf32>
      %41 = arith.addf %38, %40 : vector<32x16xf32>
      %c0_23 = arith.constant 0 : index
      %c0_24 = arith.constant 0 : index
      %42 = vector.load %arg7[%c0_23, %c0_24] : memref<32x16xf32, #tpu.memory_space<vmem>>, vector<32x16xf32>
      tpu.vector_store %arg7[%c0_23, %c0_24], %41 {strides = array<i32>} : memref<32x16xf32, #tpu.memory_space<vmem>>, vector<32x16xf32>,
    } else {
    }
    return
  }
  func.func @transform_0(%arg0: i32, %arg1: i32) -> (i32, i32) {
    %c0_i32 = arith.constant 0 : i32
    return %arg0, %arg1 : i32, i32
  }
  func.func @transform_1(%arg0: i32, %arg1: i32) -> (i32, i32) {
    %c0_i32 = arith.constant 0 : i32
    %c0_i32_0 = arith.constant 0 : i32
    return %arg1, %c0_i32 : i32, i32
  }
  func.func @transform_2(%arg0: i32, %arg1: i32) -> (i32, i32) {
    %c0_i32 = arith.constant 0 : i32
    %c0_i32_0 = arith.constant 0 : i32
    %c0_i32_1 = arith.constant 0 : i32
    return %c0_i32, %c0_i32_0 : i32, i32
  }
  func.func @transform_3(%arg0: i32, %arg1: i32) -> (i32, i32) {
    %c0_i32 = arith.constant 0 : i32
    %c0_i32_0 = arith.constant 0 : i32
    %c0_i32_1 = arith.constant 0 : i32
    return %c0_i32, %c0_i32_0 : i32, i32
  }
  func.func @transform_4(%arg0: i32, %arg1: i32) -> (i32, i32) {
    %c0_i32 = arith.constant 0 : i32
    %c0_i32_0 = arith.constant 0 : i32
    %c0_i32_1 = arith.constant 0 : i32
    return %c0_i32, %c0_i32_0 : i32, i32
  }
  func.func @transform_5(%arg0: i32, %arg1: i32) -> (i32, i32) {
    %c0_i32 = arith.constant 0 : i32
    %c0_i32_0 = arith.constant 0 : i32
    return %arg0, %c0_i32 : i32, i32
  }
}

</mosaic_0001>

<llo_original>
// kernel: tpu_custom_call.1
$region0: #{tpu_custom_call.1}
  #allocation0 [shape = 'u32[]', space=smem, size = 0x4, offset = 0x4, fixed_abs, tag = 'smem constant byte address 0x4 - core index']
  #allocation1 [shape = 'u32[144,128]{1,0:T(1,128)}', space=vmem, size = 0x12000, scoped, tag = 'internal scratch']
  #allocation2 [shape = 'f32[32,16]{1,0:T(8,128)}', space=vmem, size = 0x4000, scoped, tag = 'scratch operand']
  %s0 = inlined_call_operand.vmem [shape: f32[32,64], index: 0, kind: input, shape index: {}]
  %s1 = inlined_call_operand.vmem [shape: f32[64,16], index: 1, kind: input, shape index: {}]
  %s2 = inlined_call_operand.vmem [shape: f32[1,16], index: 2, kind: input, shape index: {}]
  %s3 = inlined_call_operand.vmem [shape: f32[1,16], index: 3, kind: input, shape index: {}]
  %s4 = inlined_call_operand.vmem [shape: f32[1,16], index: 4, kind: input, shape index: {}]
  %s5 = inlined_call_operand.vmem [shape: f32[32,16], index: 5, kind: output, shape index: {}]
  %s6 = sld [smem:[#allocation0]]
  $region38: #{tpu_custom_call.1} parent=0
    _
  %s8 = ssub.s32 1, %s6
  %s9 = scalar_select 0, %s8, %s6
  // Predicated region
  $region2: #{tpu_custom_call.1} parent=0 // pred_check
    _
  $region3: #{tpu_custom_call.1} parent=0 // pred_check_branch
    %11 = sbr.rel (0) target = $region5
  $region4: #{tpu_custom_call.1} parent=0 // pred_region
    _
  $region5: #{tpu_custom_call.1} parent=0 // pred_fallthru
    _
  // Predicated region
  $region6: #{tpu_custom_call.1} parent=0 // pred_check
    _
  $region7: #{tpu_custom_call.1} parent=0 // pred_check_branch
    %13 = sbr.rel (0) target = $region9
  $region8: #{tpu_custom_call.1} parent=0 // pred_region
    _
  $region9: #{tpu_custom_call.1} parent=0 // pred_fallthru
    _
  // Predicated region
  $region10: #{tpu_custom_call.1} parent=0 // pred_check
    _
  $region11: #{tpu_custom_call.1} parent=0 // pred_check_branch
    %15 = sbr.rel (0) target = $region13
  $region12: #{tpu_custom_call.1} parent=0 // pred_region
    _
  $region13: #{tpu_custom_call.1} parent=0 // pred_fallthru
    _
  // Predicated region
  $region14: #{tpu_custom_call.1} parent=0 // pred_check
    _
  $region15: #{tpu_custom_call.1} parent=0 // pred_check_branch
    %17 = sbr.rel (0) target = $region17
  $region16: #{tpu_custom_call.1} parent=0 // pred_region
    _
  $region17: #{tpu_custom_call.1} parent=0 // pred_fallthru
    _
  // Predicated region
  $region18: #{tpu_custom_call.1} parent=0 // pred_check
    _
  $region19: #{tpu_custom_call.1} parent=0 // pred_check_branch
    %19 = sbr.rel (0) target = $region21
  $region20: #{tpu_custom_call.1} parent=0 // pred_region
    _
  $region21: #{tpu_custom_call.1} parent=0 // pred_fallthru
    _
  %p21 = scmp.eq.s32.totalorder 0, 0
  // Predicated region
  $region22: #{tpu_custom_call.1} parent=0 // pred_check
    %p22 = pneg %p21
  $region23: #{tpu_custom_call.1} parent=0 // pred_check_branch
    %24 = sbr.rel (%p22) target = $region25
  $region24: #{tpu_custom_call.1} parent=0 // pred_region
    %vm25 = vcmask 130048
    %26 = vst.msk [vmem:[#allocation2] sm:$0xff] %vm25, 0.0
    %27 = vst.msk [vmem:[#allocation2 + $0x8] sm:$0xff] %vm25, 0.0
    %28 = vst.msk [vmem:[#allocation2 + $0x10] sm:$0xff] %vm25, 0.0
    %29 = vst.msk [vmem:[#allocation2 + $0x18] sm:$0xff] %vm25, 0.0
  $region25: #{tpu_custom_call.1} parent=0 // pred_fallthru
    _
  %v30 = vld [vmem:[#allocation2] sm:$0xff]
  %v31 = vld [vmem:[#allocation2 + $0x8] sm:$0xff]
  %v32 = vld [vmem:[#allocation2 + $0x10] sm:$0xff]
  %v33 = vld [vmem:[#allocation2 + $0x18] sm:$0xff]
  %v34 = vld [vmem:[%s0] sm:$0xff]
  %v35 = vld [vmem:[%s0 + $0x8] sm:$0xff]
  %v36 = vld [vmem:[%s0 + $0x10] sm:$0xff]
  %v37 = vld [vmem:[%s0 + $0x18] sm:$0xff]
  %v38 = vpack.c.bf16 %v35, %v34
  %v39 = vpack.c.bf16 %v37, %v36
  %v40 = vld [vmem:[%s1] sm:$0xff]
  %v41 = vld [vmem:[%s1 + $0x8] sm:$0xff]
  %v42 = vld [vmem:[%s1 + $0x10] sm:$0xff]
  %v43 = vld [vmem:[%s1 + $0x18] sm:$0xff]
  %v44 = vld [vmem:[%s1 + $0x20] sm:$0xff]
  %v45 = vld [vmem:[%s1 + $0x28] sm:$0xff]
  %v46 = vld [vmem:[%s1 + $0x30] sm:$0xff]
  %v47 = vld [vmem:[%s1 + $0x38] sm:$0xff]
  %v48 = vpack.c.bf16 %v41, %v40
  %v49 = vpack.c.bf16 %v43, %v42
  %v50 = vpack.c.bf16 %v45, %v44
  %v51 = vpack.c.bf16 %v47, %v46
  %vm52 = vcmask 523264
  %v54 = vsel %vm52, %v38, 0
  %v57 = vsel %vm52, %v39, 0
  %59 = vmatprep.subr.bf16.mxu0 0
  %60 = vmatpush1.bf16.msra.mxu0 %v48
  %61 = vmatprep.subr.bf16.mxu0 0
  %62 = vmatpush1.bf16.msra.mxu0 %v49
  %63 = vmatprep.subr.bf16.mxu0 0
  %64 = vmatpush1.bf16.msra.mxu0 %v50
  %65 = vmatprep.subr.bf16.mxu0 0
  %66 = vmatpush1.bf16.msra.mxu0 %v51
  %67 = vmatprep.subr.bf16.mxu0 0
  %68 = vmatpush1.bf16.msra.mxu0 0
  %69 = vmatprep.subr.bf16.mxu0 0
  %70 = vmatpush1.bf16.msra.mxu0 0
  %71 = vmatprep.subr.bf16.mxu0 0
  %72 = vmatpush1.bf16.msra.mxu0 0
  %73 = vmatprep.subr.bf16.mxu0 0
  %74 = vmatpush1.bf16.msra.mxu0 0
  %75 = vmatprep.subr.bf16.mxu0 0
  %76 = vmatpush1.bf16.msra.mxu0 0
  %77 = vmatprep.subr.bf16.mxu0 0
  %78 = vmatpush1.bf16.msra.mxu0 0
  %79 = vmatprep.subr.bf16.mxu0 0
  %80 = vmatpush1.bf16.msra.mxu0 0
  %81 = vmatprep.subr.bf16.mxu0 0
  %82 = vmatpush1.bf16.msra.mxu0 0
  %83 = vmatprep.subr.bf16.mxu0 0
  %84 = vmatpush1.bf16.msra.mxu0 0
  %85 = vmatprep.subr.bf16.mxu0 0
  %86 = vmatpush1.bf16.msra.mxu0 0
  %87 = vmatprep.subr.bf16.mxu0 0
  %88 = vmatpush1.bf16.msra.mxu0 0
  %89 = vmatprep.subr.bf16.mxu0 0
  %90 = vmatpush1.bf16.msra.mxu0 0
  %91 = vmatprep.mubr.bf16.mxu0 0
  %92 = vmatmul.mubr.bf16.gmra.mrb[0].mxu0 %v54
  %v93 = vpop.f32.mrb[0].mxu0
  %v94 = vadd.f32 0.0, %v93
  %v95 = vpop.f32.mrb[0].mxu0
  %v96 = vpop.f32.mrb[0].mxu0
  %v97 = vadd.f32 0.0, %v96
  %v98 = vpop.f32.mrb[0].mxu0
  %99 = vmatprep.mubr.bf16.mxu0 0
  %100 = vmatmul.mubr.bf16.gmra.mrb[0].mxu0 %v57
  %v101 = vpop.f32.mrb[0].mxu0
  %v102 = vadd.f32 0.0, %v101
  %v103 = vpop.f32.mrb[0].mxu0
  %v104 = vpop.f32.mrb[0].mxu0
  %v105 = vadd.f32 0.0, %v104
  %v106 = vpop.f32.mrb[0].mxu0
  %107 = vdwg.mxu0
  %v108 = vadd.f32 %v30, %v94
  %v109 = vadd.f32 %v31, %v97
  %v110 = vadd.f32 %v32, %v102
  %v111 = vadd.f32 %v33, %v105
  %vm112 = vcmask 130048
  %113 = vst.msk [vmem:[#allocation2] sm:$0xff] %vm112, %v108
  %114 = vst.msk [vmem:[#allocation2 + $0x8] sm:$0xff] %vm112, %v109
  %115 = vst.msk [vmem:[#allocation2 + $0x10] sm:$0xff] %vm112, %v110
  %116 = vst.msk [vmem:[#allocation2 + $0x18] sm:$0xff] %vm112, %v111
  // Predicated region
  $region26: #{tpu_custom_call.1} parent=0 // pred_check
    %p117 = pneg %p21
  $region27: #{tpu_custom_call.1} parent=0 // pred_check_branch
    %119 = sbr.rel (%p117) target = $region29
  $region28: #{tpu_custom_call.1} parent=0 // pred_region
    %v120 = vld [vmem:[#allocation2] sm:$0xff]
    %v121 = vld [vmem:[#allocation2 + $0x8] sm:$0xff]
    %v122 = vld [vmem:[#allocation2 + $0x10] sm:$0xff]
    %v123 = vld [vmem:[#allocation2 + $0x18] sm:$0xff]
    %v124 = vld [vmem:[%s2] sm:$0x1]
    %v126 = vlaneseq
    %v127 = vshrl.u32 %v126, 7
    %v128 = vsub.s32 0, %v127
    %v129 = vrot.slane %v124, %v128
    %v131 = vadd.f32 %v120, %v129
    %v132 = vadd.f32 %v121, %v129
    %v133 = vadd.f32 %v122, %v129
    %v134 = vadd.f32 %v123, %v129
    %v135 = vsel %vm112, %v131, 0.0
    %136 = vadd.xlane.f32.xlu0 %v135
    %v137 = vpop.xlane.xlu0 %136
    %v138 = vsel %vm112, %v132, 0.0
    %139 = vadd.xlane.f32.xlu0 %v138
    %v140 = vpop.xlane.xlu0 %139
    %v141 = vsel %vm112, %v133, 0.0
    %142 = vadd.xlane.f32.xlu0 %v141
    %v143 = vpop.xlane.xlu0 %142
    %v144 = vsel %vm112, %v134, 0.0
    %145 = vadd.xlane.f32.xlu0 %v144
    %v146 = vpop.xlane.xlu0 %145
    %v147 = vrcp.pop 16.0
    %v148 = vmul.f32 %v137, %v147
    %v149 = vmul.f32 %v140, %v147
    %v150 = vmul.f32 %v143, %v147
    %v151 = vmul.f32 %v146, %v147
    %v152 = vsub.f32 %v131, %v148
    %v153 = vsub.f32 %v132, %v149
    %v154 = vsub.f32 %v133, %v150
    %v155 = vsub.f32 %v134, %v151
    %v156 = vmul.f32 %v152, %v152
    %v157 = vmul.f32 %v153, %v153
    %v158 = vmul.f32 %v154, %v154
    %v159 = vmul.f32 %v155, %v155
    %v160 = vsel %vm112, %v156, 0.0
    %161 = vadd.xlane.f32.xlu0 %v160
    %v162 = vpop.xlane.xlu0 %161
    %v163 = vsel %vm112, %v157, 0.0
    %164 = vadd.xlane.f32.xlu0 %v163
    %v165 = vpop.xlane.xlu0 %164
    %v166 = vsel %vm112, %v158, 0.0
    %167 = vadd.xlane.f32.xlu0 %v166
    %v168 = vpop.xlane.xlu0 %167
    %v169 = vsel %vm112, %v159, 0.0
    %170 = vadd.xlane.f32.xlu0 %v169
    %v171 = vpop.xlane.xlu0 %170
    %v172 = vmul.f32 %v162, %v147
    %v173 = vmul.f32 %v165, %v147
    %v174 = vmul.f32 %v168, %v147
    %v175 = vmul.f32 %v171, %v147
    %v176 = vadd.f32 %v172, 1e-06
    %v177 = vadd.f32 %v173, 1e-06
    %v178 = vadd.f32 %v174, 1e-06
    %v179 = vadd.f32 %v175, 1e-06
    %v180 = vrsqrt.pop %v176
    %v181 = vrsqrt.pop %v177
    %v182 = vrsqrt.pop %v178
    %v183 = vrsqrt.pop %v179
    %v184 = vmul.f32 %v152, %v180
    %v185 = vmul.f32 %v153, %v181
    %v186 = vmul.f32 %v154, %v182
    %v187 = vmul.f32 %v155, %v183
    %v188 = vld [vmem:[%s3] sm:$0x1]
    %v190 = vlaneseq
    %v191 = vshrl.u32 %v190, 7
    %v192 = vsub.s32 0, %v191
    %v193 = vrot.slane %v188, %v192
    %v195 = vmul.f32 %v184, %v193
    %v196 = vmul.f32 %v185, %v193
    %v197 = vmul.f32 %v186, %v193
    %v198 = vmul.f32 %v187, %v193
    %v199 = vld [vmem:[%s4] sm:$0x1]
    %v201 = vlaneseq
    %v202 = vshrl.u32 %v201, 7
    %v203 = vsub.s32 0, %v202
    %v204 = vrot.slane %v199, %v203
    %v206 = vadd.f32 %v195, %v204
    %v207 = vadd.f32 %v196, %v204
    %v208 = vadd.f32 %v197, %v204
    %v209 = vadd.f32 %v198, %v204
    %210 = vst.msk [vmem:[%s5] sm:$0xff] %vm112, %v206
    %211 = vst.msk [vmem:[%s5 + $0x8] sm:$0xff] %vm112, %v207
    %212 = vst.msk [vmem:[%s5 + $0x10] sm:$0xff] %vm112, %v208
    %213 = vst.msk [vmem:[%s5 + $0x18] sm:$0xff] %vm112, %v209
  $region29: #{tpu_custom_call.1} parent=0 // pred_fallthru
    _
  // Predicated region
  $region30: #{tpu_custom_call.1} parent=0 // pred_check
    _
  $region31: #{tpu_custom_call.1} parent=0 // pred_check_branch
    %215 = sbr.rel (0) target = $region33
  $region32: #{tpu_custom_call.1} parent=0 // pred_region
    _
  $region33: #{tpu_custom_call.1} parent=0 // pred_fallthru
    _
  // Predicated region
  $region34: #{tpu_custom_call.1} parent=0 // pred_check
    _
  $region35: #{tpu_custom_call.1} parent=0 // pred_check_branch
    %217 = sbr.rel (0) target = $region37
  $region36: #{tpu_custom_call.1} parent=0 // pred_region
    _
  $region37: #{tpu_custom_call.1} parent=0 // pred_fallthru
    _

</llo_original>
